<compile_context>
chip_gen: v6e
topology: v6e:2x2x1
jax: 0.10.0
libtpu: 0.0.40
codegen_flags: <defaults>
</compile_context>

<pallas_src>
import jax
import jax.numpy as jnp
from jax import lax
from jax.experimental import pallas as pl
from jax.experimental.pallas import tpu as pltpu


def cbow_kernel(ids_ref, emb_ref, w_ref, b_ref, out_ref):
    B, C = ids_ref.shape
    V, D = emb_ref.shape

    ids = ids_ref[...]                                          # (B, C) int32
    vocab_iota = lax.broadcasted_iota(jnp.int32, (B, V), 1)     # (B, V) lane iota

    # --- vectorized embedding-bag: counts[b, v] = #{c : ids[b, c] == v} ---
    # C is a small compile-time constant -> static unroll of independent VPU
    # compares (no serial dynamic-slice chain).  Handles duplicate ids correctly.
    counts = jnp.zeros((B, V), jnp.float32)
    for c in range(C):
        counts = counts + (vocab_iota == ids[:, c:c + 1]).astype(jnp.float32)

    # sum of context embeddings == counts @ embedding  (K = V = 128, MXU-aligned)
    bow = jnp.dot(counts, emb_ref[...],
                  preferred_element_type=jnp.float32)           # (B, D)

    # --- linear layer: (B, D) @ (D, V) + b ---
    logits = jnp.dot(bow, w_ref[...],
                     preferred_element_type=jnp.float32) + b_ref[...]   # (B, V)

    # --- log_softmax over the vocab dim (f32, max-subtracted) ---
    m = jnp.max(logits, axis=1, keepdims=True)
    shifted = logits - m
    lse = jnp.log(jnp.sum(jnp.exp(shifted), axis=1, keepdims=True))
    out_ref[...] = shifted - lse


def cbow_forward(ids, embedding, lin_weight_t, lin_bias):
    """ids: int32[C] or int32[B, C]; embedding: f32[V, D];
    lin_weight_t: f32[D, V] (nn.Linear weight pre-transposed, stored once);
    lin_bias: f32[V].  Returns f32[B, V] log-probs (B=1 for 1-D ids)."""
    ids2d = ids.reshape(1, -1) if ids.ndim == 1 else ids
    ids2d = ids2d.astype(jnp.int32)
    B, C = ids2d.shape
    V, D = embedding.shape
    b2 = lin_bias.reshape(1, V)

    cost = pl.CostEstimate(
        flops=4 * B * V * D + 2 * B * C * V,     # two matmuls + one-hot build
        transcendentals=B * V + B,               # exp row + log
        bytes_accessed=4 * (ids2d.size + embedding.size
                            + lin_weight_t.size + b2.size + B * V),
    )

    return pl.pallas_call(
        cbow_kernel,
        out_shape=jax.ShapeDtypeStruct((B, V), jnp.float32),
        grid=(1,),
        in_specs=[
            pl.BlockSpec((B, C), lambda i: (0, 0)),
            pl.BlockSpec((V, D), lambda i: (0, 0)),
            pl.BlockSpec((D, V), lambda i: (0, 0)),
            pl.BlockSpec((1, V), lambda i: (0, 0)),
        ],
        out_specs=pl.BlockSpec((B, V), lambda i: (0, 0)),
        compiler_params=pltpu.CompilerParams(
            dimension_semantics=("arbitrary",)),
        cost_estimate=cost,
    )(ids2d, embedding, lin_weight_t, b2)


def cbow_reference(ids, embedding, lin_weight, lin_bias):
    ctx = embedding[ids]                          # (C, D)
    bow = jnp.sum(ctx, axis=0).reshape(1, -1)     # (1, D)
    out = bow @ lin_weight.T + lin_bias           # (1, V)
    return jax.nn.log_softmax(out, axis=1)


if __name__ == "__main__":
    vocab_size = 128
    embedding_dim = 32
    context_size = 8

    key = jax.random.PRNGKey(0)
    k_emb, k_w, k_b, k_ids = jax.random.split(key, 4)

    # Deterministic parameter init (shapes match nn.Embedding / nn.Linear).
    embedding = jax.random.normal(k_emb, (vocab_size, embedding_dim), jnp.float32)
    bound = 1.0 / jnp.sqrt(embedding_dim)
    lin_weight = jax.random.uniform(k_w, (vocab_size, embedding_dim),
                                    jnp.float32, -bound, bound)
    lin_bias = jax.random.uniform(k_b, (vocab_size,), jnp.float32, -bound, bound)

    # Pre-transpose the Linear weight ONCE (parameter stored as (D, V)), so no
    # per-call transpose sits in front of the kernel.
    lin_weight_t = jnp.asarray(lin_weight.T)

    # --- module-equivalent path (B = 1, matches torch forward semantics) ---
    ids = jax.random.randint(k_ids, (context_size,), 0, vocab_size, jnp.int32)
    log_probs = cbow_forward(ids, embedding, lin_weight_t, lin_bias)
    jax.block_until_ready(log_probs)

    ref = cbow_reference(ids, embedding, lin_weight, lin_bias)
    assert log_probs.shape == (1, vocab_size)
    assert jnp.allclose(log_probs, ref, atol=1e-5, rtol=1e-5)

    # --- batched path (B = 8) exercising the MXU-filling formulation ---
    ids_batch = jax.random.randint(jax.random.PRNGKey(1),
                                   (8, context_size), 0, vocab_size, jnp.int32)
    log_probs_b = cbow_forward(ids_batch, embedding, lin_weight_t, lin_bias)
    jax.block_until_ready(log_probs_b)
    ref_b = jax.vmap(
        lambda r: cbow_reference(r, embedding, lin_weight, lin_bias)[0])(ids_batch)
    assert log_probs_b.shape == (8, vocab_size)
    assert jnp.allclose(log_probs_b, ref_b, atol=1e-5, rtol=1e-5)

    print("KERNEL_OK")
</pallas_src>

<mosaic_0001>
module attributes {stable_mosaic.version = 11 : i64} {
  func.func @cbow_kernel(%arg0: i32, %arg1: memref<1x8xi32, #tpu.memory_space<vmem>>, %arg2: memref<128x32xf32, #tpu.memory_space<vmem>>, %arg3: memref<32x128xf32, #tpu.memory_space<vmem>>, %arg4: memref<1x128xf32, #tpu.memory_space<vmem>>, %arg5: memref<1x128xf32, #tpu.memory_space<vmem>>) attributes {dimension_semantics = [#tpu.dimension_semantics<arbitrary>], iteration_bounds = array<i64: 1>, scalar_prefetch = 0 : i64, scratch_operands = 0 : i64, tpu.core_type = #tpu.core_type<tc>, window_params = [{pipeline_mode = #tpu.pipeline_mode<synchronous>, transform_indices = @transform_0, window_bounds = array<i64: 1, 8>}, {pipeline_mode = #tpu.pipeline_mode<synchronous>, transform_indices = @transform_1, window_bounds = array<i64: 128, 32>}, {pipeline_mode = #tpu.pipeline_mode<synchronous>, transform_indices = @transform_2, window_bounds = array<i64: 32, 128>}, {pipeline_mode = #tpu.pipeline_mode<synchronous>, transform_indices = @transform_3, window_bounds = array<i64: 1, 128>}, {pipeline_mode = #tpu.pipeline_mode<synchronous>, transform_indices = @transform_4, window_bounds = array<i64: 1, 128>}]} {
    %c0 = arith.constant 0 : index
    %c0_0 = arith.constant 0 : index
    %0 = vector.load %arg1[%c0, %c0_0] : memref<1x8xi32, #tpu.memory_space<vmem>>, vector<1x8xi32>
    %1 = tpu.iota {dimensions = array<i32: 1>} : vector<1x128xi32>
    %cst = arith.constant 0.000000e+00 : f32
    %2 = vector.broadcast %cst : f32 to vector<1x128xf32>
    %3 = vector.extract_strided_slice %0 {offsets = [0, 0], sizes = [1, 1], strides = [1, 1]} : vector<1x8xi32> to vector<1x1xi32>
    %4 = vector.broadcast %3 : vector<1x1xi32> to vector<1x128xi32>
    %5 = arith.cmpi eq, %1, %4 : vector<1x128xi32>
    %6 = arith.extui %5 : vector<1x128xi1> to vector<1x128xi32>
    %7 = arith.sitofp %6 : vector<1x128xi32> to vector<1x128xf32>
    %8 = arith.addf %2, %7 : vector<1x128xf32>
    %9 = vector.extract_strided_slice %0 {offsets = [0, 1], sizes = [1, 1], strides = [1, 1]} : vector<1x8xi32> to vector<1x1xi32>
    %10 = vector.broadcast %9 : vector<1x1xi32> to vector<1x128xi32>
    %11 = arith.cmpi eq, %1, %10 : vector<1x128xi32>
    %12 = arith.extui %11 : vector<1x128xi1> to vector<1x128xi32>
    %13 = arith.sitofp %12 : vector<1x128xi32> to vector<1x128xf32>
    %14 = arith.addf %8, %13 : vector<1x128xf32>
    %15 = vector.extract_strided_slice %0 {offsets = [0, 2], sizes = [1, 1], strides = [1, 1]} : vector<1x8xi32> to vector<1x1xi32>
    %16 = vector.broadcast %15 : vector<1x1xi32> to vector<1x128xi32>
    %17 = arith.cmpi eq, %1, %16 : vector<1x128xi32>
    %18 = arith.extui %17 : vector<1x128xi1> to vector<1x128xi32>
    %19 = arith.sitofp %18 : vector<1x128xi32> to vector<1x128xf32>
    %20 = arith.addf %14, %19 : vector<1x128xf32>
    %21 = vector.extract_strided_slice %0 {offsets = [0, 3], sizes = [1, 1], strides = [1, 1]} : vector<1x8xi32> to vector<1x1xi32>
    %22 = vector.broadcast %21 : vector<1x1xi32> to vector<1x128xi32>
    %23 = arith.cmpi eq, %1, %22 : vector<1x128xi32>
    %24 = arith.extui %23 : vector<1x128xi1> to vector<1x128xi32>
    %25 = arith.sitofp %24 : vector<1x128xi32> to vector<1x128xf32>
    %26 = arith.addf %20, %25 : vector<1x128xf32>
    %27 = vector.extract_strided_slice %0 {offsets = [0, 4], sizes = [1, 1], strides = [1, 1]} : vector<1x8xi32> to vector<1x1xi32>
    %28 = vector.broadcast %27 : vector<1x1xi32> to vector<1x128xi32>
    %29 = arith.cmpi eq, %1, %28 : vector<1x128xi32>
    %30 = arith.extui %29 : vector<1x128xi1> to vector<1x128xi32>
    %31 = arith.sitofp %30 : vector<1x128xi32> to vector<1x128xf32>
    %32 = arith.addf %26, %31 : vector<1x128xf32>
    %33 = vector.extract_strided_slice %0 {offsets = [0, 5], sizes = [1, 1], strides = [1, 1]} : vector<1x8xi32> to vector<1x1xi32>
    %34 = vector.broadcast %33 : vector<1x1xi32> to vector<1x128xi32>
    %35 = arith.cmpi eq, %1, %34 : vector<1x128xi32>
    %36 = arith.extui %35 : vector<1x128xi1> to vector<1x128xi32>
    %37 = arith.sitofp %36 : vector<1x128xi32> to vector<1x128xf32>
    %38 = arith.addf %32, %37 : vector<1x128xf32>
    %39 = vector.extract_strided_slice %0 {offsets = [0, 6], sizes = [1, 1], strides = [1, 1]} : vector<1x8xi32> to vector<1x1xi32>
    %40 = vector.broadcast %39 : vector<1x1xi32> to vector<1x128xi32>
    %41 = arith.cmpi eq, %1, %40 : vector<1x128xi32>
    %42 = arith.extui %41 : vector<1x128xi1> to vector<1x128xi32>
    %43 = arith.sitofp %42 : vector<1x128xi32> to vector<1x128xf32>
    %44 = arith.addf %38, %43 : vector<1x128xf32>
    %45 = vector.extract_strided_slice %0 {offsets = [0, 7], sizes = [1, 1], strides = [1, 1]} : vector<1x8xi32> to vector<1x1xi32>
    %46 = vector.broadcast %45 : vector<1x1xi32> to vector<1x128xi32>
    %47 = arith.cmpi eq, %1, %46 : vector<1x128xi32>
    %48 = arith.extui %47 : vector<1x128xi1> to vector<1x128xi32>
    %49 = arith.sitofp %48 : vector<1x128xi32> to vector<1x128xf32>
    %50 = arith.addf %44, %49 : vector<1x128xf32>
    %c0_1 = arith.constant 0 : index
    %c0_2 = arith.constant 0 : index
    %51 = vector.load %arg2[%c0_1, %c0_2] : memref<128x32xf32, #tpu.memory_space<vmem>>, vector<128x32xf32>
    %cst_3 = arith.constant dense<0.000000e+00> : vector<1x32xf32>
    %52 = tpu.matmul %50, %51, %cst_3 {dimension_numbers = #tpu.dot_dimension_numbers<[1], [0], [0], [1], [0, 0, 1, 1], [], []>} : vector<1x128xf32>, vector<128x32xf32>, vector<1x32xf32> -> vector<1x32xf32>
    %c0_4 = arith.constant 0 : index
    %c0_5 = arith.constant 0 : index
    %53 = vector.load %arg3[%c0_4, %c0_5] : memref<32x128xf32, #tpu.memory_space<vmem>>, vector<32x128xf32>
    %cst_6 = arith.constant dense<0.000000e+00> : vector<1x128xf32>
    %54 = tpu.matmul %52, %53, %cst_6 {dimension_numbers = #tpu.dot_dimension_numbers<[1], [0], [0], [1], [0, 0, 1, 1], [], []>} : vector<1x32xf32>, vector<32x128xf32>, vector<1x128xf32> -> vector<1x128xf32>
    %c0_7 = arith.constant 0 : index
    %c0_8 = arith.constant 0 : index
    %55 = vector.load %arg4[%c0_7, %c0_8] : memref<1x128xf32, #tpu.memory_space<vmem>>, vector<1x128xf32>
    %56 = arith.addf %54, %55 : vector<1x128xf32>
    %cst_9 = arith.constant dense<0xFF800000> : vector<1xf32>
    %57 = vector.multi_reduction <maximumf>, %56, %cst_9 [1] : vector<1x128xf32> to vector<1xf32>
    %58 = vector.shape_cast %57 : vector<1xf32> to vector<1x1xf32>
    %59 = vector.broadcast %58 : vector<1x1xf32> to vector<1x128xf32>
    %60 = arith.subf %56, %59 : vector<1x128xf32>
    %61 = math.exp %60 : vector<1x128xf32>
    %cst_10 = arith.constant dense<0.000000e+00> : vector<1xf32>
    %62 = vector.multi_reduction <add>, %61, %cst_10 [1] : vector<1x128xf32> to vector<1xf32>
    %63 = vector.shape_cast %62 : vector<1xf32> to vector<1x1xf32>
    %64 = math.log %63 : vector<1x1xf32>
    %65 = vector.broadcast %64 : vector<1x1xf32> to vector<1x128xf32>
    %66 = arith.subf %60, %65 : vector<1x128xf32>
    %c0_11 = arith.constant 0 : index
    %c0_12 = arith.constant 0 : index
    %67 = vector.load %arg5[%c0_11, %c0_12] : memref<1x128xf32, #tpu.memory_space<vmem>>, vector<1x128xf32>
    tpu.vector_store %arg5[%c0_11, %c0_12], %66 {strides = array<i32>} : memref<1x128xf32, #tpu.memory_space<vmem>>, vector<1x128xf32>,
    return
  }
  func.func @transform_0(%arg0: i32) -> (i32, i32) {
    %c0_i32 = arith.constant 0 : i32
    %c0_i32_0 = arith.constant 0 : i32
    %c0_i32_1 = arith.constant 0 : i32
    return %c0_i32, %c0_i32_0 : i32, i32
  }
  func.func @transform_1(%arg0: i32) -> (i32, i32) {
    %c0_i32 = arith.constant 0 : i32
    %c0_i32_0 = arith.constant 0 : i32
    %c0_i32_1 = arith.constant 0 : i32
    return %c0_i32, %c0_i32_0 : i32, i32
  }
  func.func @transform_2(%arg0: i32) -> (i32, i32) {
    %c0_i32 = arith.constant 0 : i32
    %c0_i32_0 = arith.constant 0 : i32
    %c0_i32_1 = arith.constant 0 : i32
    return %c0_i32, %c0_i32_0 : i32, i32
  }
  func.func @transform_3(%arg0: i32) -> (i32, i32) {
    %c0_i32 = arith.constant 0 : i32
    %c0_i32_0 = arith.constant 0 : i32
    %c0_i32_1 = arith.constant 0 : i32
    return %c0_i32, %c0_i32_0 : i32, i32
  }
  func.func @transform_4(%arg0: i32) -> (i32, i32) {
    %c0_i32 = arith.constant 0 : i32
    %c0_i32_0 = arith.constant 0 : i32
    %c0_i32_1 = arith.constant 0 : i32
    return %c0_i32, %c0_i32_0 : i32, i32
  }
}

</mosaic_0001>

<llo_original>
// kernel: tpu_custom_call.1
$region0: #{tpu_custom_call.1}
  #allocation0 [shape = 'u32[]', space=smem, size = 0x4, offset = 0x4, fixed_abs, tag = 'smem constant byte address 0x4 - core index']
  #allocation1 [shape = 'u32[144,128]{1,0:T(1,128)}', space=vmem, size = 0x12000, scoped, tag = 'internal scratch']
  %s0 = inlined_call_operand.vmem [shape: s32[1,8], index: 0, kind: input, shape index: {}]
  %s1 = inlined_call_operand.vmem [shape: f32[128,32], index: 1, kind: input, shape index: {}]
  %s2 = inlined_call_operand.vmem [shape: f32[32,128], index: 2, kind: input, shape index: {}]
  %s3 = inlined_call_operand.vmem [shape: f32[1,128], index: 3, kind: input, shape index: {}]
  %s4 = inlined_call_operand.hbm [shape: f32[1,128], index: 4, kind: output, shape index: {}]
  %s5 = sld [smem:[#allocation0]]
  $region26: #{tpu_custom_call.1} parent=0
    _
  %s7 = ssub.s32 1, %s5
  %s8 = scalar_select 0, %s7, %s5
  $region1: #{tpu_custom_call.1} parent=0
    #allocation2 [shape = 'u8[512]{0}', space=vmem, size = 0x400, scoped, tag = 'output window, operand 0, single buffered']
    #allocation3 [shape = 's32[1]{0}', space=sflag, size = 0x4, scoped, tag = 'scoped memory for tpu_custom_call.1']
    %9 = vsyncpa [#allocation3], 0
    // Predicated region
    $region2: #{tpu_custom_call.1} parent=1 // pred_check
      _
    $region3: #{tpu_custom_call.1} parent=1 // pred_check_branch
      %11 = sbr.rel (0) target = $region5
    $region4: #{tpu_custom_call.1} parent=1 // pred_region
      _
    $region5: #{tpu_custom_call.1} parent=1 // pred_fallthru
      _
    // Predicated region
    $region6: #{tpu_custom_call.1} parent=1 // pred_check
      _
    $region7: #{tpu_custom_call.1} parent=1 // pred_check_branch
      %13 = sbr.rel (0) target = $region9
    $region8: #{tpu_custom_call.1} parent=1 // pred_region
      _
    $region9: #{tpu_custom_call.1} parent=1 // pred_fallthru
      _
    // Predicated region
    $region10: #{tpu_custom_call.1} parent=1 // pred_check
      _
    $region11: #{tpu_custom_call.1} parent=1 // pred_check_branch
      %15 = sbr.rel (0) target = $region13
    $region12: #{tpu_custom_call.1} parent=1 // pred_region
      _
    $region13: #{tpu_custom_call.1} parent=1 // pred_fallthru
      _
    // Predicated region
    $region14: #{tpu_custom_call.1} parent=1 // pred_check
      _
    $region15: #{tpu_custom_call.1} parent=1 // pred_check_branch
      %17 = sbr.rel (0) target = $region17
    $region16: #{tpu_custom_call.1} parent=1 // pred_region
      _
    $region17: #{tpu_custom_call.1} parent=1 // pred_fallthru
      _
    %v18 = vld [vmem:[%s0] sm:$0x1]
    %v19 = vlaneseq
    %v20 = vand.u32 %v19, 127
    %21 = vset.pattern.permute.xlu0 0
    %22 = vperm.xlu0 %21, %v18
    %v23 = vpop.permute.xlu0 %22
    %v24 = vlaneseq
    %v25 = vshrl.u32 %v24, 7
    %v26 = vsub.s32 0, %v25
    %v27 = vrot.slane %v23, %v26
    %vm28 = vcmp.eq.s32.totalorder %v20, %v27
    %v29 = vsel %vm28, 1, 0
    %v30 = vcvt.s32.f32 %v29
    %v31 = vadd.f32 %v30, 0.0
    %32 = vset.pattern.permute.xlu0 1
    %33 = vperm.xlu0 %32, %v18
    %v34 = vpop.permute.xlu0 %33
    %v35 = vlaneseq
    %v36 = vshrl.u32 %v35, 7
    %v37 = vsub.s32 0, %v36
    %v38 = vrot.slane %v34, %v37
    %vm39 = vcmp.eq.s32.totalorder %v20, %v38
    %v40 = vsel %vm39, 1, 0
    %v41 = vcvt.s32.f32 %v40
    %v42 = vadd.f32 %v31, %v41
    %43 = vset.pattern.permute.xlu0 2
    %44 = vperm.xlu0 %43, %v18
    %v45 = vpop.permute.xlu0 %44
    %v46 = vlaneseq
    %v47 = vshrl.u32 %v46, 7
    %v48 = vsub.s32 0, %v47
    %v49 = vrot.slane %v45, %v48
    %vm50 = vcmp.eq.s32.totalorder %v20, %v49
    %v51 = vsel %vm50, 1, 0
    %v52 = vcvt.s32.f32 %v51
    %v53 = vadd.f32 %v42, %v52
    %54 = vset.pattern.permute.xlu0 3
    %55 = vperm.xlu0 %54, %v18
    %v56 = vpop.permute.xlu0 %55
    %v57 = vlaneseq
    %v58 = vshrl.u32 %v57, 7
    %v59 = vsub.s32 0, %v58
    %v60 = vrot.slane %v56, %v59
    %vm61 = vcmp.eq.s32.totalorder %v20, %v60
    %v62 = vsel %vm61, 1, 0
    %v63 = vcvt.s32.f32 %v62
    %v64 = vadd.f32 %v53, %v63
    %65 = vset.pattern.permute.xlu0 4
    %66 = vperm.xlu0 %65, %v18
    %v67 = vpop.permute.xlu0 %66
    %v68 = vlaneseq
    %v69 = vshrl.u32 %v68, 7
    %v70 = vsub.s32 0, %v69
    %v71 = vrot.slane %v67, %v70
    %vm72 = vcmp.eq.s32.totalorder %v20, %v71
    %v73 = vsel %vm72, 1, 0
    %v74 = vcvt.s32.f32 %v73
    %v75 = vadd.f32 %v64, %v74
    %76 = vset.pattern.permute.xlu0 5
    %77 = vperm.xlu0 %76, %v18
    %v78 = vpop.permute.xlu0 %77
    %v79 = vlaneseq
    %v80 = vshrl.u32 %v79, 7
    %v81 = vsub.s32 0, %v80
    %v82 = vrot.slane %v78, %v81
    %vm83 = vcmp.eq.s32.totalorder %v20, %v82
    %v84 = vsel %vm83, 1, 0
    %v85 = vcvt.s32.f32 %v84
    %v86 = vadd.f32 %v75, %v85
    %87 = vset.pattern.permute.xlu0 6
    %88 = vperm.xlu0 %87, %v18
    %v89 = vpop.permute.xlu0 %88
    %v90 = vlaneseq
    %v91 = vshrl.u32 %v90, 7
    %v92 = vsub.s32 0, %v91
    %v93 = vrot.slane %v89, %v92
    %vm94 = vcmp.eq.s32.totalorder %v20, %v93
    %v95 = vsel %vm94, 1, 0
    %v96 = vcvt.s32.f32 %v95
    %v97 = vadd.f32 %v86, %v96
    %98 = vset.pattern.permute.xlu0 7
    %99 = vperm.xlu0 %98, %v18
    %v100 = vpop.permute.xlu0 %99
    %v101 = vlaneseq
    %v102 = vshrl.u32 %v101, 7
    %v103 = vsub.s32 0, %v102
    %v104 = vrot.slane %v100, %v103
    %vm105 = vcmp.eq.s32.totalorder %v20, %v104
    %v106 = vsel %vm105, 1, 0
    %v107 = vcvt.s32.f32 %v106
    %v108 = vadd.f32 %v97, %v107
    %v109 = vld [vmem:[%s1] sm:$0xff]
    %v110 = vld [vmem:[%s1 + $0x8] sm:$0xff]
    %v111 = vld [vmem:[%s1 + $0x10] sm:$0xff]
    %v112 = vld [vmem:[%s1 + $0x18] sm:$0xff]
    %v113 = vld [vmem:[%s1 + $0x20] sm:$0xff]
    %v114 = vld [vmem:[%s1 + $0x28] sm:$0xff]
    %v115 = vld [vmem:[%s1 + $0x30] sm:$0xff]
    %v116 = vld [vmem:[%s1 + $0x38] sm:$0xff]
    %v117 = vld [vmem:[%s1 + $0x40] sm:$0xff]
    %v118 = vld [vmem:[%s1 + $0x48] sm:$0xff]
    %v119 = vld [vmem:[%s1 + $0x50] sm:$0xff]
    %v120 = vld [vmem:[%s1 + $0x58] sm:$0xff]
    %v121 = vld [vmem:[%s1 + $0x60] sm:$0xff]
    %v122 = vld [vmem:[%s1 + $0x68] sm:$0xff]
    %v123 = vld [vmem:[%s1 + $0x70] sm:$0xff]
    %v124 = vld [vmem:[%s1 + $0x78] sm:$0xff]
    %125 = vmatprep.subr.mxu0 0.0
    %126 = vmatpush1.msra.mxu0 %v124
    %127 = vmatprep.subr.mxu0 0.0
    %128 = vmatpush1.msra.mxu0 %v123
    %129 = vmatprep.subr.mxu0 0.0
    %130 = vmatpush1.msra.mxu0 %v122
    %131 = vmatprep.subr.mxu0 0.0
    %132 = vmatpush1.msra.mxu0 %v121
    %133 = vmatprep.subr.mxu0 0.0
    %134 = vmatpush1.msra.mxu0 %v120
    %135 = vmatprep.subr.mxu0 0.0
    %136 = vmatpush1.msra.mxu0 %v119
    %137 = vmatprep.subr.mxu0 0.0
    %138 = vmatpush1.msra.mxu0 %v118
    %139 = vmatprep.subr.mxu0 0.0
    %140 = vmatpush1.msra.mxu0 %v117
    %141 = vmatprep.subr.mxu0 0.0
    %142 = vmatpush1.msra.mxu0 %v116
    %143 = vmatprep.subr.mxu0 0.0
    %144 = vmatpush1.msra.mxu0 %v115
    %145 = vmatprep.subr.mxu0 0.0
    %146 = vmatpush1.msra.mxu0 %v114
    %147 = vmatprep.subr.mxu0 0.0
    %148 = vmatpush1.msra.mxu0 %v113
    %149 = vmatprep.subr.mxu0 0.0
    %150 = vmatpush1.msra.mxu0 %v112
    %151 = vmatprep.subr.mxu0 0.0
    %152 = vmatpush1.msra.mxu0 %v111
    %153 = vmatprep.subr.mxu0 0.0
    %154 = vmatpush1.msra.mxu0 %v110
    %155 = vmatprep.subr.mxu0 0.0
    %156 = vmatpush1.msra.mxu0 %v109
    %157 = vmatprep.subr.mxu0 0.0
    %158 = vmatpush2.msra.mxu0 0.0
    %159 = vmatprep.subr.mxu0 0.0
    %160 = vmatpush2.msra.mxu0 0.0
    %161 = vmatprep.subr.mxu0 0.0
    %162 = vmatpush2.msra.mxu0 0.0
    %163 = vmatprep.subr.mxu0 0.0
    %164 = vmatpush2.msra.mxu0 0.0
    %165 = vmatprep.subr.mxu0 0.0
    %166 = vmatpush2.msra.mxu0 0.0
    %167 = vmatprep.subr.mxu0 0.0
    %168 = vmatpush2.msra.mxu0 0.0
    %169 = vmatprep.subr.mxu0 0.0
    %170 = vmatpush2.msra.mxu0 0.0
    %171 = vmatprep.subr.mxu0 0.0
    %172 = vmatpush2.msra.mxu0 0.0
    %173 = vmatprep.subr.mxu0 0.0
    %174 = vmatpush2.msra.mxu0 0.0
    %175 = vmatprep.subr.mxu0 0.0
    %176 = vmatpush2.msra.mxu0 0.0
    %177 = vmatprep.subr.mxu0 0.0
    %178 = vmatpush2.msra.mxu0 0.0
    %179 = vmatprep.subr.mxu0 0.0
    %180 = vmatpush2.msra.mxu0 0.0
    %181 = vmatprep.subr.mxu0 0.0
    %182 = vmatpush2.msra.mxu0 0.0
    %183 = vmatprep.subr.mxu0 0.0
    %184 = vmatpush2.msra.mxu0 0.0
    %185 = vmatprep.subr.mxu0 0.0
    %186 = vmatpush2.msra.mxu0 0.0
    %187 = vmatprep.subr.mxu0 0.0
    %188 = vmatpush2.msra.mxu0 0.0
    %189 = vmatprep.mubr.f32.mxu0 0.0
    %190 = vmatmul.mubr.f32.gmra.mxu0 %v108
    %v191 = vpop.f32.mrf.mxu0
    %v192 = vadd.f32 0.0, %v191
    %v193 = vpop.f32.mrf.mxu0
    %194 = vdwg.mxu0
    %v195 = vld [vmem:[%s2] sm:$0xff]
    %v196 = vld [vmem:[%s2 + $0x8] sm:$0xff]
    %v197 = vld [vmem:[%s2 + $0x10] sm:$0xff]
    %v198 = vld [vmem:[%s2 + $0x18] sm:$0xff]
    %v199 = vld [vmem:[%s3] sm:$0x1]
    %vm200 = vcmask 261120
    %v202 = vsel %vm200, %v192, 0
    %204 = vmatprep.subr.mxu0 0.0
    %205 = vmatpush1.msra.mxu0 0.0
    %206 = vmatprep.subr.mxu0 0.0
    %207 = vmatpush1.msra.mxu0 0.0
    %208 = vmatprep.subr.mxu0 0.0
    %209 = vmatpush1.msra.mxu0 0.0
    %210 = vmatprep.subr.mxu0 0.0
    %211 = vmatpush1.msra.mxu0 0.0
    %212 = vmatprep.subr.mxu0 0.0
    %213 = vmatpush1.msra.mxu0 0.0
    %214 = vmatprep.subr.mxu0 0.0
    %215 = vmatpush1.msra.mxu0 0.0
    %216 = vmatprep.subr.mxu0 0.0
    %217 = vmatpush1.msra.mxu0 0.0
    %218 = vmatprep.subr.mxu0 0.0
    %219 = vmatpush1.msra.mxu0 0.0
    %220 = vmatprep.subr.mxu0 0.0
    %221 = vmatpush1.msra.mxu0 0.0
    %222 = vmatprep.subr.mxu0 0.0
    %223 = vmatpush1.msra.mxu0 0.0
    %224 = vmatprep.subr.mxu0 0.0
    %225 = vmatpush1.msra.mxu0 0.0
    %226 = vmatprep.subr.mxu0 0.0
    %227 = vmatpush1.msra.mxu0 0.0
    %228 = vmatprep.subr.mxu0 0.0
    %229 = vmatpush1.msra.mxu0 %v198
    %230 = vmatprep.subr.mxu0 0.0
    %231 = vmatpush1.msra.mxu0 %v197
    %232 = vmatprep.subr.mxu0 0.0
    %233 = vmatpush1.msra.mxu0 %v196
    %234 = vmatprep.subr.mxu0 0.0
    %235 = vmatpush1.msra.mxu0 %v195
    %236 = vmatprep.subr.mxu0 0.0
    %237 = vmatpush2.msra.mxu0 0.0
    %238 = vmatprep.subr.mxu0 0.0
    %239 = vmatpush2.msra.mxu0 0.0
    %240 = vmatprep.subr.mxu0 0.0
    %241 = vmatpush2.msra.mxu0 0.0
    %242 = vmatprep.subr.mxu0 0.0
    %243 = vmatpush2.msra.mxu0 0.0
    %244 = vmatprep.subr.mxu0 0.0
    %245 = vmatpush2.msra.mxu0 0.0
    %246 = vmatprep.subr.mxu0 0.0
    %247 = vmatpush2.msra.mxu0 0.0
    %248 = vmatprep.subr.mxu0 0.0
    %249 = vmatpush2.msra.mxu0 0.0
    %250 = vmatprep.subr.mxu0 0.0
    %251 = vmatpush2.msra.mxu0 0.0
    %252 = vmatprep.subr.mxu0 0.0
    %253 = vmatpush2.msra.mxu0 0.0
    %254 = vmatprep.subr.mxu0 0.0
    %255 = vmatpush2.msra.mxu0 0.0
    %256 = vmatprep.subr.mxu0 0.0
    %257 = vmatpush2.msra.mxu0 0.0
    %258 = vmatprep.subr.mxu0 0.0
    %259 = vmatpush2.msra.mxu0 0.0
    %260 = vmatprep.subr.mxu0 0.0
    %261 = vmatpush2.msra.mxu0 0.0
    %262 = vmatprep.subr.mxu0 0.0
    %263 = vmatpush2.msra.mxu0 0.0
    %264 = vmatprep.subr.mxu0 0.0
    %265 = vmatpush2.msra.mxu0 0.0
    %266 = vmatprep.subr.mxu0 0.0
    %267 = vmatpush2.msra.mxu0 0.0
    %268 = vmatprep.mubr.f32.mxu0 0.0
    %269 = vmatmul.mubr.f32.gmra.mxu0 %v202
    %v270 = vpop.f32.mrf.mxu0
    %v271 = vadd.f32 %v199, %v270
    %v272 = vpop.f32.mrf.mxu0
    %273 = vdwg.mxu0
    %vm274 = vcmask 1040384
    %v275 = vsel %vm274, %v271, -inf
    %276 = vmax.xlane.f32.xlu0 %v275
    %v277 = vpop.xlane.xlu0 %276
    %v278 = vsub.f32 %v271, %v277
    %v279 = vmul.f32 %v278, 1.442695
    %v280 = vpow.pop %v279
    %v281 = vsel %vm274, %v280, 0.0
    %282 = vadd.xlane.f32.xlu0 %v281
    %v283 = vpop.xlane.xlu0 %282
    %v284 = vlog2.pop %v283
    %v285 = vmul.f32 %v284, 0.6931472
    %v286 = vsub.f32 %v278, %v285
    %287 = vst [vmem:[#allocation2] sm:$0x1] %v286
    // Predicated region
    $region18: #{tpu_custom_call.1} parent=1 // pred_check
      _
    $region19: #{tpu_custom_call.1} parent=1 // pred_check_branch
      %289 = sbr.rel (0) target = $region21
    $region20: #{tpu_custom_call.1} parent=1 // pred_region
      %s291 = ssub.s32 16, 16
      %292 = vsyncadd [#allocation3], %s291
      %s294 = sshll.u32 [#allocation2], 4
      %s295 = int_to_ptr.vmem [resolvable:$true] %s294
      %297 = dma.vmem_to_hbm [thread:$0]  %s295, 16, %s4, [#allocation3]
    $region21: #{tpu_custom_call.1} parent=1 // pred_fallthru
      _
    // Predicated region
    $region22: #{tpu_custom_call.1} parent=1 // pred_check
      _
    $region23: #{tpu_custom_call.1} parent=1 // pred_check_branch
      %299 = sbr.rel (0) target = $region25
    $region24: #{tpu_custom_call.1} parent=1 // pred_region
      %300 = dma.done [#allocation3], 16
    $region25: #{tpu_custom_call.1} parent=1 // pred_fallthru
      _
    %301 = vsyncpa [#allocation3], 1

</llo_original>
